<compile_context>
chip_gen: v7x
topology: tpu7x:2x2x1
jax: 0.10.0
libtpu: 0.0.40
codegen_flags: <defaults>
</compile_context>

<pallas_src>
import jax
import jax.numpy as jnp
from jax.experimental import pallas as pl
from jax.experimental.pallas import tpu as pltpu


def _critic_kernel(sb_ref, y_ref, w1_ref, w2_ref, b2_ref, w3_ref, b3_ref, q_ref):
    """Transposed layout: activations are (features, TN); TN on the lane axis.

    sb_ref : (TB, 2H, 1) f32   precomputed state @ W1[:S] + b1 per batch row
    y_ref  : (TB, A, TN) bf16  action tile, already transposed to (A, N)
    q_ref  : (TB, 2, TN) f32   row 0 = q1, row 1 = q2  (lane-dense store)
    """
    w1 = w1_ref[...]            # (2H, A)   bf16
    w2 = w2_ref[...]            # (2H, 2H)  bf16, block-diagonal (heads independent)
    w3 = w3_ref[...]            # (2, 2H)   bf16
    b2 = b2_ref[...]            # (2H, 1)   f32
    b3 = b3_ref[...]            # (2, 1)    f32

    tb = y_ref.shape[0]
    for b in range(tb):         # static unroll (TB <= 8)
        x = y_ref[b]                                                    # (A, TN)
        # Layer 1 (y part); the state part + b1 is already folded into sb.
        h = jnp.dot(w1, x, preferred_element_type=jnp.float32) + sb_ref[b]
        h = jnp.maximum(h, 0.0).astype(jnp.bfloat16)                    # (2H, TN)
        # Layer 2: block-diagonal fused weights keep the two Q-heads independent.
        h = jnp.dot(w2, h, preferred_element_type=jnp.float32) + b2
        h = jnp.maximum(h, 0.0).astype(jnp.bfloat16)                    # (2H, TN)
        # Layer 3 -> (2, TN): lane-dense output rows for both heads.
        q = jnp.dot(w3, h, preferred_element_type=jnp.float32) + b3
        q_ref[b] = q.astype(q_ref.dtype)


def prepare_critic_params(params, state_dim):
    """One-off fusion/transposition of the two Q-head MLPs (do NOT call per step)."""
    (w1a, b1a, w2a, b2a, w3a, b3a, w1b, b1b, w2b, b2b, w3b, b3b) = params
    S = state_dim
    H = w2a.shape[0]

    # Layer 1: heads fused along the output dim; split across the concat([state,y])
    # boundary (x @ W1 == state @ W1[:S] + y @ W1[S:]), so the HBM concat is gone.
    w1 = jnp.concatenate([w1a, w1b], axis=1)                               # (D, 2H)
    w1s = w1[:S].astype(jnp.bfloat16)                                      # (S, 2H)  wrapper-side
    w1yT = w1[S:].T.astype(jnp.bfloat16)                                   # (2H, A)  in-kernel
    b1 = jnp.concatenate([b1a, b1b], axis=1).astype(jnp.float32)           # (1, 2H)

    # Layer 2 (transposed): block-diag(w2a^T, w2b^T).  See NOTE above re: large H.
    zH = jnp.zeros((H, H), w2a.dtype)
    w2t = jnp.concatenate(
        [jnp.concatenate([w2a.T, zH], axis=1),
         jnp.concatenate([zH, w2b.T], axis=1)], axis=0).astype(jnp.bfloat16)  # (2H, 2H)
    b2t = jnp.concatenate([b2a, b2b], axis=1).T.astype(jnp.float32)            # (2H, 1)

    # Layer 3 (transposed): (2, 2H) so row 0 = q1, row 1 = q2.
    z1 = jnp.zeros((1, H), w3a.dtype)
    w3t = jnp.concatenate(
        [jnp.concatenate([w3a.T, z1], axis=1),
         jnp.concatenate([z1, w3b.T], axis=1)], axis=0).astype(jnp.bfloat16)   # (2, 2H)
    b3t = jnp.concatenate([b3a.T, b3b.T], axis=0).astype(jnp.float32)          # (2, 1)

    return dict(w1s=w1s, b1=b1, w1yT=w1yT, w2t=w2t, b2t=b2t, w3t=w3t, b3t=b3t)


def critic_mlp_forward(state, y, fused, *, tile_n=512, target_rows=512, max_tb=8):
    """state: (B, S), y: (B, N, A). Returns (q1, q2), each (B*N, 1) float32."""
    B, N, A = y.shape
    H2 = fused["w2t"].shape[0]                      # 2H (fused hidden width)

    # --- hoisted state projection: one small matmul per batch row, not per step ---
    sb = (jnp.dot(state.astype(jnp.bfloat16), fused["w1s"],
                  preferred_element_type=jnp.float32) + fused["b1"])      # (B, 2H) f32
    sb = sb[:, :, None]                                                    # (B, 2H, 1)

    # --- transposed activation layout: rows (N) go on the lane axis ---
    y_t = jnp.swapaxes(y, 1, 2).astype(jnp.bfloat16)                       # (B, A, N)

    # Row tiling: TN is a multiple of 128 (or the full N); when N is small, fold
    # several batch rows into one block (TB) so a grid step has >= ~target_rows rows.
    TN = tile_n if N > tile_n else N
    want = max(1, min(max_tb, target_rows // max(TN, 1)))
    TB = 1
    for d in range(1, B + 1):                       # largest divisor of B <= want
        if B % d == 0 and d <= want:
            TB = d
    n_tiles = pl.cdiv(N, TN)
    grid = (B // TB, n_tiles)
    # NOTE: padded tail columns of a partial N tile compute garbage but the output
    # writeback is clipped, so results are unaffected (no in-kernel N reduction).

    def resident(shape):
        return pl.BlockSpec(shape, lambda i, n: (0,) * len(shape))

    flops = 2 * B * N * (A * H2 + H2 * H2 + H2 * 2)
    bytes_accessed = (y_t.size * 2 + sb.size * 4
                      + (fused["w1yT"].size + fused["w2t"].size + fused["w3t"].size) * 2
                      + (fused["b2t"].size + fused["b3t"].size) * 4
                      + B * N * 2 * 4)

    q_t = pl.pallas_call(
        _critic_kernel,
        out_shape=jax.ShapeDtypeStruct((B, 2, N), jnp.float32),
        grid=grid,
        in_specs=[
            pl.BlockSpec((TB, H2, 1), lambda i, n: (i, 0, 0)),   # sb (per batch rows)
            pl.BlockSpec((TB, A, TN), lambda i, n: (i, 0, n)),   # y tile (transposed)
            resident((H2, A)),                                   # W1[S:]^T
            resident((H2, H2)),                                  # W2^T (block-diag)
            resident((H2, 1)),                                   # b2^T
            resident((2, H2)),                                   # W3^T
            resident((2, 1)),                                    # b3^T
        ],
        out_specs=pl.BlockSpec((TB, 2, TN), lambda i, n: (i, 0, n)),
        compiler_params=pltpu.CompilerParams(
            dimension_semantics=("parallel", "parallel"),
            vmem_limit_bytes=32 * 1024 * 1024,
        ),
        cost_estimate=pl.CostEstimate(
            flops=flops, transcendentals=0, bytes_accessed=bytes_accessed),
    )(sb, y_t, fused["w1yT"], fused["w2t"], fused["b2t"],
      fused["w3t"], fused["b3t"])

    q1 = q_t[:, 0, :].reshape(B * N, 1)
    q2 = q_t[:, 1, :].reshape(B * N, 1)
    return q1, q2


def init_params(key, in_dim, hidden_dim):
    """Deterministic init of two independent Q-head MLPs (x @ W + b layout)."""
    keys = jax.random.split(key, 12)

    def lin(kw, kb, fan_in, fan_out):
        scale = 1.0 / jnp.sqrt(fan_in)
        w = jax.random.uniform(kw, (fan_in, fan_out), jnp.float32, -scale, scale)
        b = jax.random.uniform(kb, (1, fan_out), jnp.float32, -scale, scale)
        return w, b

    w1a, b1a = lin(keys[0], keys[1], in_dim, hidden_dim)
    w2a, b2a = lin(keys[2], keys[3], hidden_dim, hidden_dim)
    w3a, b3a = lin(keys[4], keys[5], hidden_dim, 1)
    w1b, b1b = lin(keys[6], keys[7], in_dim, hidden_dim)
    w2b, b2b = lin(keys[8], keys[9], hidden_dim, hidden_dim)
    w3b, b3b = lin(keys[10], keys[11], hidden_dim, 1)
    return (w1a, b1a, w2a, b2a, w3a, b3a, w1b, b1b, w2b, b2b, w3b, b3b)


def _reference_f32(state, y, params):
    """Pure-f32 reference matching the PyTorch module semantics."""
    B, N, _ = y.shape
    S = state.shape[-1]
    fused = jnp.concatenate(
        [jnp.broadcast_to(state[:, None, :], (B, N, S)), y], axis=-1
    ).reshape(B * N, -1).astype(jnp.float32)
    (w1a, b1a, w2a, b2a, w3a, b3a, w1b, b1b, w2b, b2b, w3b, b3b) = params

    def head(x, w1, b1, w2, b2, w3, b3):
        h = jnp.maximum(x @ w1 + b1, 0.0)
        h = jnp.maximum(h @ w2 + b2, 0.0)
        return h @ w3 + b3

    return (head(fused, w1a, b1a, w2a, b2a, w3a, b3a),
            head(fused, w1b, b1b, w2b, b2b, w3b, b3b))


def _reference_bf16(state, y, params):
    """Reference mirroring the kernel's bf16-in / f32-accumulate numerics."""
    B, N, _ = y.shape
    S = state.shape[-1]
    s_rep = jnp.repeat(state.astype(jnp.bfloat16), N, axis=0)      # (B*N, S)
    x = y.reshape(B * N, -1).astype(jnp.bfloat16)                  # (B*N, A)
    (w1a, b1a, w2a, b2a, w3a, b3a, w1b, b1b, w2b, b2b, w3b, b3b) = params

    def head(w1, b1, w2, b2, w3, b3):
        w1_16 = w1.astype(jnp.bfloat16)
        h = (jnp.dot(s_rep, w1_16[:S], preferred_element_type=jnp.float32)
             + jnp.dot(x, w1_16[S:], preferred_element_type=jnp.float32) + b1)
        h = jnp.maximum(h, 0.0).astype(jnp.bfloat16)
        h = jnp.dot(h, w2.astype(jnp.bfloat16), preferred_element_type=jnp.float32) + b2
        h = jnp.maximum(h, 0.0).astype(jnp.bfloat16)
        return jnp.dot(h, w3.astype(jnp.bfloat16), preferred_element_type=jnp.float32) + b3

    return (head(w1a, b1a, w2a, b2a, w3a, b3a),
            head(w1b, b1b, w2b, b2b, w3b, b3b))


if __name__ == "__main__":
    # Small shapes consistent with the module's forward (3-D y branch).
    B, N = 2, 8
    state_dim, action_dim = 16, 16
    hidden_dim = 32
    D = state_dim + action_dim  # 32

    key = jax.random.PRNGKey(0)
    k_state, k_y, k_params = jax.random.split(key, 3)

    state = jax.random.normal(k_state, (B, state_dim), jnp.float32)
    y = jax.random.normal(k_y, (B, N, action_dim), jnp.float32)
    params = init_params(k_params, D, hidden_dim)

    # One-off weight fusion (outside the per-call jitted path).
    fused = prepare_critic_params(params, state_dim)

    fwd = jax.jit(critic_mlp_forward)
    q1, q2 = fwd(state, y, fused)
    q1 = jax.block_until_ready(q1)
    q2 = jax.block_until_ready(q2)

    assert q1.shape == (B * N, 1) and q2.shape == (B * N, 1)

    # Tight check against a reference with identical bf16/f32 numerics.
    rb1, rb2 = _reference_bf16(state, y, params)
    assert jnp.allclose(q1, rb1, atol=1e-3, rtol=1e-3)
    assert jnp.allclose(q2, rb2, atol=1e-3, rtol=1e-3)

    # Looser check against the pure-f32 module semantics (bf16 feed tolerance).
    rf1, rf2 = _reference_f32(state, y, params)
    assert jnp.allclose(q1, rf1, atol=5e-2, rtol=5e-2)
    assert jnp.allclose(q2, rf2, atol=5e-2, rtol=5e-2)

    print("KERNEL_OK")
</pallas_src>

<mosaic_0001>
module attributes {stable_mosaic.version = 11 : i64} {
  func.func @_critic_kernel(%arg0: i32, %arg1: i32, %arg2: memref<2x64x1xf32, #tpu.memory_space<vmem>>, %arg3: memref<2x16x8xbf16, #tpu.memory_space<vmem>>, %arg4: memref<64x16xbf16, #tpu.memory_space<vmem>>, %arg5: memref<64x64xbf16, #tpu.memory_space<vmem>>, %arg6: memref<64x1xf32, #tpu.memory_space<vmem>>, %arg7: memref<2x64xbf16, #tpu.memory_space<vmem>>, %arg8: memref<2x1xf32, #tpu.memory_space<vmem>>, %arg9: memref<2x2x8xf32, #tpu.memory_space<vmem>>) attributes {dimension_semantics = [#tpu.dimension_semantics<parallel>, #tpu.dimension_semantics<parallel>], iteration_bounds = array<i64: 1, 1>, scalar_prefetch = 0 : i64, scratch_operands = 0 : i64, tpu.core_type = #tpu.core_type<tc>, window_params = [{transform_indices = @transform_0, window_bounds = array<i64: 2, 64, 1>}, {transform_indices = @transform_1, window_bounds = array<i64: 2, 16, 8>}, {pipeline_mode = #tpu.pipeline_mode<synchronous>, transform_indices = @transform_2, window_bounds = array<i64: 64, 16>}, {pipeline_mode = #tpu.pipeline_mode<synchronous>, transform_indices = @transform_3, window_bounds = array<i64: 64, 64>}, {pipeline_mode = #tpu.pipeline_mode<synchronous>, transform_indices = @transform_4, window_bounds = array<i64: 64, 1>}, {pipeline_mode = #tpu.pipeline_mode<synchronous>, transform_indices = @transform_5, window_bounds = array<i64: 2, 64>}, {pipeline_mode = #tpu.pipeline_mode<synchronous>, transform_indices = @transform_6, window_bounds = array<i64: 2, 1>}, {transform_indices = @transform_7, window_bounds = array<i64: 2, 2, 8>}]} {
    %c0 = arith.constant 0 : index
    %c0_0 = arith.constant 0 : index
    %0 = vector.load %arg4[%c0, %c0_0] : memref<64x16xbf16, #tpu.memory_space<vmem>>, vector<64x16xbf16>
    %c0_1 = arith.constant 0 : index
    %c0_2 = arith.constant 0 : index
    %1 = vector.load %arg5[%c0_1, %c0_2] : memref<64x64xbf16, #tpu.memory_space<vmem>>, vector<64x64xbf16>
    %c0_3 = arith.constant 0 : index
    %c0_4 = arith.constant 0 : index
    %2 = vector.load %arg7[%c0_3, %c0_4] : memref<2x64xbf16, #tpu.memory_space<vmem>>, vector<2x64xbf16>
    %c0_5 = arith.constant 0 : index
    %c0_6 = arith.constant 0 : index
    %3 = vector.load %arg6[%c0_5, %c0_6] : memref<64x1xf32, #tpu.memory_space<vmem>>, vector<64x1xf32>
    %c0_7 = arith.constant 0 : index
    %c0_8 = arith.constant 0 : index
    %4 = vector.load %arg8[%c0_7, %c0_8] : memref<2x1xf32, #tpu.memory_space<vmem>>, vector<2x1xf32>
    %c0_9 = arith.constant 0 : index
    %c0_10 = arith.constant 0 : index
    %c0_11 = arith.constant 0 : index
    %5 = vector.load %arg3[%c0_9, %c0_10, %c0_11] : memref<2x16x8xbf16, #tpu.memory_space<vmem>>, vector<1x16x8xbf16>
    %6 = vector.shape_cast %5 : vector<1x16x8xbf16> to vector<16x8xbf16>
    %cst = arith.constant dense<0.000000e+00> : vector<64x8xf32>
    %7 = tpu.matmul %0, %6, %cst {dimension_numbers = #tpu.dot_dimension_numbers<[1], [0], [0], [1], [0, 0, 1, 1], [], []>} : vector<64x16xbf16>, vector<16x8xbf16>, vector<64x8xf32> -> vector<64x8xf32>
    %c0_12 = arith.constant 0 : index
    %c0_13 = arith.constant 0 : index
    %c0_14 = arith.constant 0 : index
    %8 = vector.load %arg2[%c0_12, %c0_13, %c0_14] : memref<2x64x1xf32, #tpu.memory_space<vmem>>, vector<1x64x1xf32>
    %9 = vector.shape_cast %8 : vector<1x64x1xf32> to vector<64x1xf32>
    %10 = vector.broadcast %9 : vector<64x1xf32> to vector<64x8xf32>
    %11 = arith.addf %7, %10 : vector<64x8xf32>
    %cst_15 = arith.constant 0.000000e+00 : f32
    %12 = vector.broadcast %cst_15 : f32 to vector<64x8xf32>
    %13 = arith.maximumf %11, %12 : vector<64x8xf32>
    %14 = arith.truncf %13 : vector<64x8xf32> to vector<64x8xbf16>
    %cst_16 = arith.constant dense<0.000000e+00> : vector<64x8xf32>
    %15 = tpu.matmul %1, %14, %cst_16 {dimension_numbers = #tpu.dot_dimension_numbers<[1], [0], [0], [1], [0, 0, 1, 1], [], []>} : vector<64x64xbf16>, vector<64x8xbf16>, vector<64x8xf32> -> vector<64x8xf32>
    %16 = vector.broadcast %3 : vector<64x1xf32> to vector<64x8xf32>
    %17 = arith.addf %15, %16 : vector<64x8xf32>
    %cst_17 = arith.constant 0.000000e+00 : f32
    %18 = vector.broadcast %cst_17 : f32 to vector<64x8xf32>
    %19 = arith.maximumf %17, %18 : vector<64x8xf32>
    %20 = arith.truncf %19 : vector<64x8xf32> to vector<64x8xbf16>
    %cst_18 = arith.constant dense<0.000000e+00> : vector<2x8xf32>
    %21 = tpu.matmul %2, %20, %cst_18 {dimension_numbers = #tpu.dot_dimension_numbers<[1], [0], [0], [1], [0, 0, 1, 1], [], []>} : vector<2x64xbf16>, vector<64x8xbf16>, vector<2x8xf32> -> vector<2x8xf32>
    %22 = vector.broadcast %4 : vector<2x1xf32> to vector<2x8xf32>
    %23 = arith.addf %21, %22 : vector<2x8xf32>
    %c0_19 = arith.constant 0 : index
    %c0_20 = arith.constant 0 : index
    %c0_21 = arith.constant 0 : index
    %24 = vector.load %arg9[%c0_19, %c0_20, %c0_21] : memref<2x2x8xf32, #tpu.memory_space<vmem>>, vector<1x2x8xf32>
    %25 = vector.shape_cast %24 : vector<1x2x8xf32> to vector<2x8xf32>
    %26 = vector.shape_cast %23 : vector<2x8xf32> to vector<1x2x8xf32>
    tpu.vector_store %arg9[%c0_19, %c0_20, %c0_21], %26 {strides = array<i32>} : memref<2x2x8xf32, #tpu.memory_space<vmem>>, vector<1x2x8xf32>,
    %c1 = arith.constant 1 : index
    %c0_22 = arith.constant 0 : index
    %c0_23 = arith.constant 0 : index
    %27 = vector.load %arg3[%c1, %c0_22, %c0_23] : memref<2x16x8xbf16, #tpu.memory_space<vmem>>, vector<1x16x8xbf16>
    %28 = vector.shape_cast %27 : vector<1x16x8xbf16> to vector<16x8xbf16>
    %cst_24 = arith.constant dense<0.000000e+00> : vector<64x8xf32>
    %29 = tpu.matmul %0, %28, %cst_24 {dimension_numbers = #tpu.dot_dimension_numbers<[1], [0], [0], [1], [0, 0, 1, 1], [], []>} : vector<64x16xbf16>, vector<16x8xbf16>, vector<64x8xf32> -> vector<64x8xf32>
    %c1_25 = arith.constant 1 : index
    %c0_26 = arith.constant 0 : index
    %c0_27 = arith.constant 0 : index
    %30 = vector.load %arg2[%c1_25, %c0_26, %c0_27] : memref<2x64x1xf32, #tpu.memory_space<vmem>>, vector<1x64x1xf32>
    %31 = vector.shape_cast %30 : vector<1x64x1xf32> to vector<64x1xf32>
    %32 = vector.broadcast %31 : vector<64x1xf32> to vector<64x8xf32>
    %33 = arith.addf %29, %32 : vector<64x8xf32>
    %cst_28 = arith.constant 0.000000e+00 : f32
    %34 = vector.broadcast %cst_28 : f32 to vector<64x8xf32>
    %35 = arith.maximumf %33, %34 : vector<64x8xf32>
    %36 = arith.truncf %35 : vector<64x8xf32> to vector<64x8xbf16>
    %cst_29 = arith.constant dense<0.000000e+00> : vector<64x8xf32>
    %37 = tpu.matmul %1, %36, %cst_29 {dimension_numbers = #tpu.dot_dimension_numbers<[1], [0], [0], [1], [0, 0, 1, 1], [], []>} : vector<64x64xbf16>, vector<64x8xbf16>, vector<64x8xf32> -> vector<64x8xf32>
    %38 = vector.broadcast %3 : vector<64x1xf32> to vector<64x8xf32>
    %39 = arith.addf %37, %38 : vector<64x8xf32>
    %cst_30 = arith.constant 0.000000e+00 : f32
    %40 = vector.broadcast %cst_30 : f32 to vector<64x8xf32>
    %41 = arith.maximumf %39, %40 : vector<64x8xf32>
    %42 = arith.truncf %41 : vector<64x8xf32> to vector<64x8xbf16>
    %cst_31 = arith.constant dense<0.000000e+00> : vector<2x8xf32>
    %43 = tpu.matmul %2, %42, %cst_31 {dimension_numbers = #tpu.dot_dimension_numbers<[1], [0], [0], [1], [0, 0, 1, 1], [], []>} : vector<2x64xbf16>, vector<64x8xbf16>, vector<2x8xf32> -> vector<2x8xf32>
    %44 = vector.broadcast %4 : vector<2x1xf32> to vector<2x8xf32>
    %45 = arith.addf %43, %44 : vector<2x8xf32>
    %c1_32 = arith.constant 1 : index
    %c0_33 = arith.constant 0 : index
    %c0_34 = arith.constant 0 : index
    %46 = vector.load %arg9[%c1_32, %c0_33, %c0_34] : memref<2x2x8xf32, #tpu.memory_space<vmem>>, vector<1x2x8xf32>
    %47 = vector.shape_cast %46 : vector<1x2x8xf32> to vector<2x8xf32>
    %48 = vector.shape_cast %45 : vector<2x8xf32> to vector<1x2x8xf32>
    tpu.vector_store %arg9[%c1_32, %c0_33, %c0_34], %48 {strides = array<i32>} : memref<2x2x8xf32, #tpu.memory_space<vmem>>, vector<1x2x8xf32>,
    return
  }
  func.func @transform_0(%arg0: i32, %arg1: i32) -> (i32, i32, i32) {
    %c0_i32 = arith.constant 0 : i32
    %c0_i32_0 = arith.constant 0 : i32
    %c0_i32_1 = arith.constant 0 : i32
    return %arg0, %c0_i32, %c0_i32_0 : i32, i32, i32
  }
  func.func @transform_1(%arg0: i32, %arg1: i32) -> (i32, i32, i32) {
    %c0_i32 = arith.constant 0 : i32
    %c0_i32_0 = arith.constant 0 : i32
    return %arg0, %c0_i32, %arg1 : i32, i32, i32
  }
  func.func @transform_2(%arg0: i32, %arg1: i32) -> (i32, i32) {
    %c0_i32 = arith.constant 0 : i32
    %c0_i32_0 = arith.constant 0 : i32
    %c0_i32_1 = arith.constant 0 : i32
    return %c0_i32, %c0_i32_0 : i32, i32
  }
  func.func @transform_3(%arg0: i32, %arg1: i32) -> (i32, i32) {
    %c0_i32 = arith.constant 0 : i32
    %c0_i32_0 = arith.constant 0 : i32
    %c0_i32_1 = arith.constant 0 : i32
    return %c0_i32, %c0_i32_0 : i32, i32
  }
  func.func @transform_4(%arg0: i32, %arg1: i32) -> (i32, i32) {
    %c0_i32 = arith.constant 0 : i32
    %c0_i32_0 = arith.constant 0 : i32
    %c0_i32_1 = arith.constant 0 : i32
    return %c0_i32, %c0_i32_0 : i32, i32
  }
  func.func @transform_5(%arg0: i32, %arg1: i32) -> (i32, i32) {
    %c0_i32 = arith.constant 0 : i32
    %c0_i32_0 = arith.constant 0 : i32
    %c0_i32_1 = arith.constant 0 : i32
    return %c0_i32, %c0_i32_0 : i32, i32
  }
  func.func @transform_6(%arg0: i32, %arg1: i32) -> (i32, i32) {
    %c0_i32 = arith.constant 0 : i32
    %c0_i32_0 = arith.constant 0 : i32
    %c0_i32_1 = arith.constant 0 : i32
    return %c0_i32, %c0_i32_0 : i32, i32
  }
  func.func @transform_7(%arg0: i32, %arg1: i32) -> (i32, i32, i32) {
    %c0_i32 = arith.constant 0 : i32
    %c0_i32_0 = arith.constant 0 : i32
    return %arg0, %c0_i32, %arg1 : i32, i32, i32
  }
}

</mosaic_0001>

<llo_original>
// kernel: squeeze.3
$region0: #{squeeze.3}
  %s0 = inlined_call_operand.vmem [shape: f32[2,8], index: 0, kind: input, shape index: {}]
  %s1 = inlined_call_operand.hbm [shape: f32[16,1], index: 1, kind: output, shape index: {}]
  $region1: #{squeeze.3} parent=0
    #allocation0 [shape = 'u8[512]{0}', space=vmem, size = 0x400, scoped, tag = 'operand span for operand 1']
    #allocation1 [shape = 's32[1]{0}', space=sflag, size = 0x4, scoped, tag = 'scoped memory for squeeze.3']
    #allocation2 [shape = 'u8[4096]{0}', space=vmem, size = 0x1000, scoped, tag = 'scoped mem for output reshape']
    #allocation3 [shape = 'u8[4096]{0}', space=vmem, size = 0x1000, scoped, tag = 'scoped mem for input reshape']
    %2 = vsyncpa [#allocation1], 0
    %s4 = sshllo.u32 0, 2
    %v5 = vld [vmem:[%s0] sm:%s4]
    %6 = vst [vmem:[#allocation3] sm:%s4] %v5
    %v7 = vld [vmem:[#allocation3] sm:$0x1]
    %vm8 = vcmask 64512
    %9 = vst.msk [vmem:[#allocation2] sm:$0x1] %vm8, %v7
    %s10 = scalar_lea.vmem [#allocation3], 1
    %v11 = vld [vmem:[%s10] sm:$0x1]
    %12 = vrot.lane.b32.xlu0 %v11, 8
    %v13 = vpop.permute.xlu0 %12
    %vm14 = vcmask 130112
    %15 = vst.msk [vmem:[#allocation2] sm:$0x1] %vm14, %v13
    %s17 = sshllo.u32 0, 1
    %v19 = vld [vmem:[#allocation2] sm:%s17]
    %s20 = sshllo.u32 0, 1
    %21 = vst [vmem:[#allocation0] sm:%s20] %v19
    %s23 = ssub.s32 16, 16
    %24 = vsyncadd [#allocation1], %s23
    %s26 = sshll.u32 [#allocation0], 4
    %s27 = int_to_ptr.vmem [resolvable:$true] %s26
    %29 = dma.vmem_to_hbm [thread:$0]  %s27, 16, %s1, [#allocation1]
    %30 = dma.done [#allocation1], 16
    %31 = vsyncpa [#allocation1], 1

// kernel: critic_mlp_forward.1
$region0: #{critic_mlp_forward.1}
  #allocation0 [shape = 'u32[]', space=smem, size = 0x4, offset = 0x4, fixed_abs, tag = 'smem constant byte address 0x4 - core index']
  #allocation1 [shape = 'u32[144,128]{1,0:T(1,128)}', space=vmem, size = 0x12000, scoped, tag = 'internal scratch']
  %s0 = inlined_call_operand.vmem [shape: f32[2,64,1], index: 0, kind: input, shape index: {}]
  %s1 = inlined_call_operand.vmem [shape: bf16[2,16,8], index: 1, kind: input, shape index: {}]
  %s2 = inlined_call_operand.vmem [shape: bf16[64,16], index: 2, kind: input, shape index: {}]
  %s3 = inlined_call_operand.vmem [shape: bf16[64,64], index: 3, kind: input, shape index: {}]
  %s4 = inlined_call_operand.vmem [shape: f32[64,1], index: 4, kind: input, shape index: {}]
  %s5 = inlined_call_operand.vmem [shape: bf16[2,64], index: 5, kind: input, shape index: {}]
  %s6 = inlined_call_operand.vmem [shape: f32[2,1], index: 6, kind: input, shape index: {}]
  %s7 = inlined_call_operand.vmem [shape: f32[2,2,8], index: 7, kind: output, shape index: {}]
  %s8 = sld [smem:[#allocation0]]
  $region38: #{critic_mlp_forward.1} parent=0
    _
  %s10 = ssub.s32 1, %s8
  %s11 = scalar_select 0, %s10, %s8
  // Predicated region
  $region2: #{critic_mlp_forward.1} parent=0 // pred_check
    _
  $region3: #{critic_mlp_forward.1} parent=0 // pred_check_branch
    %13 = sbr.rel (0) target = $region5
  $region4: #{critic_mlp_forward.1} parent=0 // pred_region
    _
  $region5: #{critic_mlp_forward.1} parent=0 // pred_fallthru
    _
  // Predicated region
  $region6: #{critic_mlp_forward.1} parent=0 // pred_check
    _
  $region7: #{critic_mlp_forward.1} parent=0 // pred_check_branch
    %15 = sbr.rel (0) target = $region9
  $region8: #{critic_mlp_forward.1} parent=0 // pred_region
    _
  $region9: #{critic_mlp_forward.1} parent=0 // pred_fallthru
    _
  // Predicated region
  $region10: #{critic_mlp_forward.1} parent=0 // pred_check
    _
  $region11: #{critic_mlp_forward.1} parent=0 // pred_check_branch
    %17 = sbr.rel (0) target = $region13
  $region12: #{critic_mlp_forward.1} parent=0 // pred_region
    _
  $region13: #{critic_mlp_forward.1} parent=0 // pred_fallthru
    _
  // Predicated region
  $region14: #{critic_mlp_forward.1} parent=0 // pred_check
    _
  $region15: #{critic_mlp_forward.1} parent=0 // pred_check_branch
    %19 = sbr.rel (0) target = $region17
  $region16: #{critic_mlp_forward.1} parent=0 // pred_region
    _
  $region17: #{critic_mlp_forward.1} parent=0 // pred_fallthru
    _
  // Predicated region
  $region18: #{critic_mlp_forward.1} parent=0 // pred_check
    _
  $region19: #{critic_mlp_forward.1} parent=0 // pred_check_branch
    %21 = sbr.rel (0) target = $region21
  $region20: #{critic_mlp_forward.1} parent=0 // pred_region
    _
  $region21: #{critic_mlp_forward.1} parent=0 // pred_fallthru
    _
  // Predicated region
  $region22: #{critic_mlp_forward.1} parent=0 // pred_check
    _
  $region23: #{critic_mlp_forward.1} parent=0 // pred_check_branch
    %23 = sbr.rel (0) target = $region25
  $region24: #{critic_mlp_forward.1} parent=0 // pred_region
    _
  $region25: #{critic_mlp_forward.1} parent=0 // pred_fallthru
    _
  // Predicated region
  $region26: #{critic_mlp_forward.1} parent=0 // pred_check
    _
  $region27: #{critic_mlp_forward.1} parent=0 // pred_check_branch
    %25 = sbr.rel (0) target = $region29
  $region28: #{critic_mlp_forward.1} parent=0 // pred_region
    _
  $region29: #{critic_mlp_forward.1} parent=0 // pred_fallthru
    _
  %v27 = vld [vmem:[%s2] sm:$0xf]
  %v28 = vld [vmem:[%s2 + $0x4] sm:$0xf]
  %v29 = vld [vmem:[%s2 + $0x8] sm:$0xf]
  %v30 = vld [vmem:[%s2 + $0xc] sm:$0xf]
  %v31 = vld [vmem:[%s2 + $0x10] sm:$0xf]
  %v32 = vld [vmem:[%s2 + $0x14] sm:$0xf]
  %v33 = vld [vmem:[%s2 + $0x18] sm:$0xf]
  %v34 = vld [vmem:[%s2 + $0x1c] sm:$0xf]
  %v35 = vld [vmem:[%s3] sm:$0xf]
  %v36 = vld [vmem:[%s3 + $0x4] sm:$0xf]
  %v37 = vld [vmem:[%s3 + $0x8] sm:$0xf]
  %v38 = vld [vmem:[%s3 + $0xc] sm:$0xf]
  %v39 = vld [vmem:[%s3 + $0x10] sm:$0xf]
  %v40 = vld [vmem:[%s3 + $0x14] sm:$0xf]
  %v41 = vld [vmem:[%s3 + $0x18] sm:$0xf]
  %v42 = vld [vmem:[%s3 + $0x1c] sm:$0xf]
  %v43 = vld [vmem:[%s5] sm:$0x1]
  %v44 = vld [vmem:[%s4] sm:$0xff]
  %v45 = vld [vmem:[%s4 + $0x8] sm:$0xff]
  %v46 = vld [vmem:[%s4 + $0x10] sm:$0xff]
  %v47 = vld [vmem:[%s4 + $0x18] sm:$0xff]
  %v48 = vld [vmem:[%s4 + $0x20] sm:$0xff]
  %v49 = vld [vmem:[%s4 + $0x28] sm:$0xff]
  %v50 = vld [vmem:[%s4 + $0x30] sm:$0xff]
  %v51 = vld [vmem:[%s4 + $0x38] sm:$0xff]
  %v52 = vld [vmem:[%s6] sm:$0x3]
  %v53 = vld [vmem:[%s1] sm:$0xf]
  %v54 = vld [vmem:[%s1 + $0x4] sm:$0xf]
  %v55 = vld [vmem:[%s0] sm:$0xff]
  %v56 = vld [vmem:[%s0 + $0x8] sm:$0xff]
  %v57 = vld [vmem:[%s0 + $0x10] sm:$0xff]
  %v58 = vld [vmem:[%s0 + $0x18] sm:$0xff]
  %v59 = vld [vmem:[%s0 + $0x20] sm:$0xff]
  %v60 = vld [vmem:[%s0 + $0x28] sm:$0xff]
  %v61 = vld [vmem:[%s0 + $0x30] sm:$0xff]
  %v62 = vld [vmem:[%s0 + $0x38] sm:$0xff]
  %64 = vset.pattern.permute.xlu0 0
  %65 = vperm.xlu0 %64, %v55
  %v66 = vpop.permute.xlu0 %65
  %69 = vset.pattern.permute.xlu0 0
  %70 = vperm.xlu0 %69, %v56
  %v71 = vpop.permute.xlu0 %70
  %74 = vset.pattern.permute.xlu0 0
  %75 = vperm.xlu0 %74, %v57
  %v76 = vpop.permute.xlu0 %75
  %79 = vset.pattern.permute.xlu0 0
  %80 = vperm.xlu0 %79, %v58
  %v81 = vpop.permute.xlu0 %80
  %84 = vset.pattern.permute.xlu0 0
  %85 = vperm.xlu0 %84, %v59
  %v86 = vpop.permute.xlu0 %85
  %89 = vset.pattern.permute.xlu0 0
  %90 = vperm.xlu0 %89, %v60
  %v91 = vpop.permute.xlu0 %90
  %94 = vset.pattern.permute.xlu0 0
  %95 = vperm.xlu0 %94, %v61
  %v96 = vpop.permute.xlu0 %95
  %99 = vset.pattern.permute.xlu0 0
  %100 = vperm.xlu0 %99, %v62
  %v101 = vpop.permute.xlu0 %100
  %v111 = vunpack.c.l.b16 %v27
  %v112 = vunpack.c.l.b16 %v28
  %v113 = vunpack.c.l.b16 %v29
  %v114 = vunpack.c.l.b16 %v30
  %v115 = vunpack.c.l.b16 %v31
  %v116 = vunpack.c.l.b16 %v32
  %v117 = vunpack.c.l.b16 %v33
  %v118 = vunpack.c.l.b16 %v34
  %v119 = vpack.c.b16 %v112, %v111
  %v120 = vpack.c.b16 %v114, %v113
  %v121 = vpack.c.b16 %v116, %v115
  %v122 = vpack.c.b16 %v118, %v117
  %v125 = vunpack.c.l.b16 %v53
  %v126 = vunpack.c.l.b16 %v54
  %v127 = vpack.c.b16 %v126, %v125
  %vm129 = vcmask 130048
  %v131 = vsel %vm129, %v119, 0
  %v134 = vsel %vm129, %v120, 0
  %v137 = vsel %vm129, %v121, 0
  %v140 = vsel %vm129, %v122, 0
  %142 = vmatprep.subr.bf16.mxu0 0
  %143 = vmatpush1.bf16.msra.mxu0 %v127
  %144 = vmatprep.subr.bf16.mxu0 0
  %145 = vmatpush1.bf16.msra.mxu0 0
  %146 = vmatprep.subr.bf16.mxu0 0
  %147 = vmatpush1.bf16.msra.mxu0 0
  %148 = vmatprep.subr.bf16.mxu0 0
  %149 = vmatpush1.bf16.msra.mxu0 0
  %150 = vmatprep.subr.bf16.mxu0 0
  %151 = vmatpush1.bf16.msra.mxu0 0
  %152 = vmatprep.subr.bf16.mxu0 0
  %153 = vmatpush1.bf16.msra.mxu0 0
  %154 = vmatprep.subr.bf16.mxu0 0
  %155 = vmatpush1.bf16.msra.mxu0 0
  %156 = vmatprep.subr.bf16.mxu0 0
  %157 = vmatpush1.bf16.msra.mxu0 0
  %158 = vmatprep.subr.bf16.mxu0 0
  %159 = vmatpush1.bf16.msra.mxu0 0
  %160 = vmatprep.subr.bf16.mxu0 0
  %161 = vmatpush1.bf16.msra.mxu0 0
  %162 = vmatprep.subr.bf16.mxu0 0
  %163 = vmatpush1.bf16.msra.mxu0 0
  %164 = vmatprep.subr.bf16.mxu0 0
  %165 = vmatpush1.bf16.msra.mxu0 0
  %166 = vmatprep.subr.bf16.mxu0 0
  %167 = vmatpush1.bf16.msra.mxu0 0
  %168 = vmatprep.subr.bf16.mxu0 0
  %169 = vmatpush1.bf16.msra.mxu0 0
  %170 = vmatprep.subr.bf16.mxu0 0
  %171 = vmatpush1.bf16.msra.mxu0 0
  %172 = vmatprep.subr.bf16.mxu0 0
  %173 = vmatpush1.bf16.msra.mxu0 0
  %174 = vmatprep.mubr.bf16.mxu0 0
  %175 = vmatmul.mubr.bf16.gmra.mrb[0].mxu0 %v131
  %v176 = vpop.f32.mrb[0].mxu0
  %v177 = vadd.f32 %v66, %v176
  %v178 = vpop.f32.mrb[0].mxu0
  %v179 = vpop.f32.mrb[0].mxu0
  %v180 = vadd.f32 %v71, %v179
  %v181 = vpop.f32.mrb[0].mxu0
  %182 = vmatprep.mubr.bf16.mxu0 0
  %183 = vmatmul.mubr.bf16.gmra.mrb[0].mxu0 %v134
  %v184 = vpop.f32.mrb[0].mxu0
  %v185 = vadd.f32 %v76, %v184
  %v186 = vpop.f32.mrb[0].mxu0
  %v187 = vpop.f32.mrb[0].mxu0
  %v188 = vadd.f32 %v81, %v187
  %v189 = vpop.f32.mrb[0].mxu0
  %190 = vmatprep.mubr.bf16.mxu0 0
  %191 = vmatmul.mubr.bf16.gmra.mrb[0].mxu0 %v137
  %v192 = vpop.f32.mrb[0].mxu0
  %v193 = vadd.f32 %v86, %v192
  %v194 = vpop.f32.mrb[0].mxu0
  %v195 = vpop.f32.mrb[0].mxu0
  %v196 = vadd.f32 %v91, %v195
  %v197 = vpop.f32.mrb[0].mxu0
  %198 = vmatprep.mubr.bf16.mxu0 0
  %199 = vmatmul.mubr.bf16.gmra.mrb[0].mxu0 %v140
  %v200 = vpop.f32.mrb[0].mxu0
  %v201 = vadd.f32 %v96, %v200
  %v202 = vpop.f32.mrb[0].mxu0
  %v203 = vpop.f32.mrb[0].mxu0
  %v204 = vadd.f32 %v101, %v203
  %v205 = vpop.f32.mrb[0].mxu0
  %206 = vdwg.mxu0
  %v207 = vmax.f32 %v177, 0.0
  %v208 = vmax.f32 %v180, 0.0
  %v209 = vmax.f32 %v185, 0.0
  %v210 = vmax.f32 %v188, 0.0
  %v211 = vmax.f32 %v193, 0.0
  %v212 = vmax.f32 %v196, 0.0
  %v213 = vmax.f32 %v201, 0.0
  %v214 = vmax.f32 %v204, 0.0
  %v215 = vpack.c.bf16 %v208, %v207
  %v216 = vpack.c.bf16 %v210, %v209
  %v217 = vpack.c.bf16 %v212, %v211
  %v218 = vpack.c.bf16 %v214, %v213
  %220 = vset.pattern.permute.xlu0 0
  %221 = vperm.xlu0 %220, %v44
  %v222 = vpop.permute.xlu0 %221
  %225 = vset.pattern.permute.xlu0 0
  %226 = vperm.xlu0 %225, %v45
  %v227 = vpop.permute.xlu0 %226
  %230 = vset.pattern.permute.xlu0 0
  %231 = vperm.xlu0 %230, %v46
  %v232 = vpop.permute.xlu0 %231
  %235 = vset.pattern.permute.xlu0 0
  %236 = vperm.xlu0 %235, %v47
  %v237 = vpop.permute.xlu0 %236
  %240 = vset.pattern.permute.xlu0 0
  %241 = vperm.xlu0 %240, %v48
  %v242 = vpop.permute.xlu0 %241
  %245 = vset.pattern.permute.xlu0 0
  %246 = vperm.xlu0 %245, %v49
  %v247 = vpop.permute.xlu0 %246
  %250 = vset.pattern.permute.xlu0 0
  %251 = vperm.xlu0 %250, %v50
  %v252 = vpop.permute.xlu0 %251
  %255 = vset.pattern.permute.xlu0 0
  %256 = vperm.xlu0 %255, %v51
  %v257 = vpop.permute.xlu0 %256
  %v267 = vunpack.c.l.b16 %v35
  %v268 = vunpack.c.l.b16 %v36
  %v269 = vunpack.c.l.b16 %v37
  %v270 = vunpack.c.l.b16 %v38
  %v271 = vunpack.c.l.b16 %v39
  %v272 = vunpack.c.l.b16 %v40
  %v273 = vunpack.c.l.b16 %v41
  %v274 = vunpack.c.l.b16 %v42
  %v275 = vpack.c.b16 %v268, %v267
  %v276 = vpack.c.b16 %v270, %v269
  %v277 = vpack.c.b16 %v272, %v271
  %v278 = vpack.c.b16 %v274, %v273
  %vm279 = vcmask 523264
  %v281 = vsel %vm279, %v275, 0
  %v284 = vsel %vm279, %v276, 0
  %v287 = vsel %vm279, %v277, 0
  %v290 = vsel %vm279, %v278, 0
  %292 = vmatprep.subr.bf16.mxu0 0
  %293 = vmatpush1.bf16.msra.mxu0 %v215
  %294 = vmatprep.subr.bf16.mxu0 0
  %295 = vmatpush1.bf16.msra.mxu0 %v216
  %296 = vmatprep.subr.bf16.mxu0 0
  %297 = vmatpush1.bf16.msra.mxu0 %v217
  %298 = vmatprep.subr.bf16.mxu0 0
  %299 = vmatpush1.bf16.msra.mxu0 %v218
  %300 = vmatprep.subr.bf16.mxu0 0
  %301 = vmatpush1.bf16.msra.mxu0 0
  %302 = vmatprep.subr.bf16.mxu0 0
  %303 = vmatpush1.bf16.msra.mxu0 0
  %304 = vmatprep.subr.bf16.mxu0 0
  %305 = vmatpush1.bf16.msra.mxu0 0
  %306 = vmatprep.subr.bf16.mxu0 0
  %307 = vmatpush1.bf16.msra.mxu0 0
  %308 = vmatprep.subr.bf16.mxu0 0
  %309 = vmatpush1.bf16.msra.mxu0 0
  %310 = vmatprep.subr.bf16.mxu0 0
  %311 = vmatpush1.bf16.msra.mxu0 0
  %312 = vmatprep.subr.bf16.mxu0 0
  %313 = vmatpush1.bf16.msra.mxu0 0
  %314 = vmatprep.subr.bf16.mxu0 0
  %315 = vmatpush1.bf16.msra.mxu0 0
  %316 = vmatprep.subr.bf16.mxu0 0
  %317 = vmatpush1.bf16.msra.mxu0 0
  %318 = vmatprep.subr.bf16.mxu0 0
  %319 = vmatpush1.bf16.msra.mxu0 0
  %320 = vmatprep.subr.bf16.mxu0 0
  %321 = vmatpush1.bf16.msra.mxu0 0
  %322 = vmatprep.subr.bf16.mxu0 0
  %323 = vmatpush1.bf16.msra.mxu0 0
  %324 = vmatprep.mubr.bf16.mxu0 0
  %325 = vmatmul.mubr.bf16.gmra.mrb[0].mxu0 %v281
  %v326 = vpop.f32.mrb[0].mxu0
  %v327 = vadd.f32 %v222, %v326
  %v328 = vpop.f32.mrb[0].mxu0
  %v329 = vpop.f32.mrb[0].mxu0
  %v330 = vadd.f32 %v227, %v329
  %v331 = vpop.f32.mrb[0].mxu0
  %332 = vmatprep.mubr.bf16.mxu0 0
  %333 = vmatmul.mubr.bf16.gmra.mrb[0].mxu0 %v284
  %v334 = vpop.f32.mrb[0].mxu0
  %v335 = vadd.f32 %v232, %v334
  %v336 = vpop.f32.mrb[0].mxu0
  %v337 = vpop.f32.mrb[0].mxu0
  %v338 = vadd.f32 %v237, %v337
  %v339 = vpop.f32.mrb[0].mxu0
  %340 = vmatprep.mubr.bf16.mxu0 0
  %341 = vmatmul.mubr.bf16.gmra.mrb[0].mxu0 %v287
  %v342 = vpop.f32.mrb[0].mxu0
  %v343 = vadd.f32 %v242, %v342
  %v344 = vpop.f32.mrb[0].mxu0
  %v345 = vpop.f32.mrb[0].mxu0
  %v346 = vadd.f32 %v247, %v345
  %v347 = vpop.f32.mrb[0].mxu0
  %348 = vmatprep.mubr.bf16.mxu0 0
  %349 = vmatmul.mubr.bf16.gmra.mrb[0].mxu0 %v290
  %v350 = vpop.f32.mrb[0].mxu0
  %v351 = vadd.f32 %v252, %v350
  %v352 = vpop.f32.mrb[0].mxu0
  %v353 = vpop.f32.mrb[0].mxu0
  %v354 = vadd.f32 %v257, %v353
  %v355 = vpop.f32.mrb[0].mxu0
  %356 = vdwg.mxu0
  %v357 = vmax.f32 %v327, 0.0
  %v358 = vmax.f32 %v330, 0.0
  %v359 = vmax.f32 %v335, 0.0
  %v360 = vmax.f32 %v338, 0.0
  %v361 = vmax.f32 %v343, 0.0
  %v362 = vmax.f32 %v346, 0.0
  %v363 = vmax.f32 %v351, 0.0
  %v364 = vmax.f32 %v354, 0.0
  %v365 = vpack.c.bf16 %v358, %v357
  %v366 = vpack.c.bf16 %v360, %v359
  %v367 = vpack.c.bf16 %v362, %v361
  %v368 = vpack.c.bf16 %v364, %v363
  %370 = vset.pattern.permute.xlu0 0
  %371 = vperm.xlu0 %370, %v52
  %v372 = vpop.permute.xlu0 %371
  %v375 = vsel %vm279, %v43, 0
  %377 = vmatprep.subr.bf16.mxu0 0
  %378 = vmatpush1.bf16.msra.mxu0 %v365
  %379 = vmatprep.subr.bf16.mxu0 0
  %380 = vmatpush1.bf16.msra.mxu0 %v366
  %381 = vmatprep.subr.bf16.mxu0 0
  %382 = vmatpush1.bf16.msra.mxu0 %v367
  %383 = vmatprep.subr.bf16.mxu0 0
  %384 = vmatpush1.bf16.msra.mxu0 %v368
  %385 = vmatprep.subr.bf16.mxu0 0
  %386 = vmatpush1.bf16.msra.mxu0 0
  %387 = vmatprep.subr.bf16.mxu0 0
  %388 = vmatpush1.bf16.msra.mxu0 0
  %389 = vmatprep.subr.bf16.mxu0 0
  %390 = vmatpush1.bf16.msra.mxu0 0
  %391 = vmatprep.subr.bf16.mxu0 0
  %392 = vmatpush1.bf16.msra.mxu0 0
  %393 = vmatprep.subr.bf16.mxu0 0
  %394 = vmatpush1.bf16.msra.mxu0 0
  %395 = vmatprep.subr.bf16.mxu0 0
  %396 = vmatpush1.bf16.msra.mxu0 0
  %397 = vmatprep.subr.bf16.mxu0 0
  %398 = vmatpush1.bf16.msra.mxu0 0
  %399 = vmatprep.subr.bf16.mxu0 0
  %400 = vmatpush1.bf16.msra.mxu0 0
  %401 = vmatprep.subr.bf16.mxu0 0
  %402 = vmatpush1.bf16.msra.mxu0 0
  %403 = vmatprep.subr.bf16.mxu0 0
  %404 = vmatpush1.bf16.msra.mxu0 0
  %405 = vmatprep.subr.bf16.mxu0 0
  %406 = vmatpush1.bf16.msra.mxu0 0
  %407 = vmatprep.subr.bf16.mxu0 0
  %408 = vmatpush1.bf16.msra.mxu0 0
  %409 = vmatprep.mubr.bf16.mxu0 0
  %410 = vmatmul.mubr.bf16.gmra.mrb[0].mxu0 %v375
  %v411 = vpop.f32.mrb[0].mxu0
  %v412 = vadd.f32 %v372, %v411
  %v413 = vpop.f32.mrb[0].mxu0
  %v414 = vpop.f32.mrb[0].mxu0
  %v415 = vpop.f32.mrb[0].mxu0
  %416 = vdwg.mxu0
  %vm417 = vcmask 58368
  %418 = vst.msk [vmem:[%s7] sm:$0x3] %vm417, %v412
  %s419 = scalar_lea.vmem %s1, 8
  %v420 = vld [vmem:[%s419] sm:$0xf]
  %v421 = vld [vmem:[%s419 + $0x4] sm:$0xf]
  %s422 = scalar_lea.vmem %s0, 64
  %v423 = vld [vmem:[%s422] sm:$0xff]
  %v424 = vld [vmem:[%s422 + $0x8] sm:$0xff]
  %v425 = vld [vmem:[%s422 + $0x10] sm:$0xff]
  %v426 = vld [vmem:[%s422 + $0x18] sm:$0xff]
  %v427 = vld [vmem:[%s422 + $0x20] sm:$0xff]
  %v428 = vld [vmem:[%s422 + $0x28] sm:$0xff]
  %v429 = vld [vmem:[%s422 + $0x30] sm:$0xff]
  %v430 = vld [vmem:[%s422 + $0x38] sm:$0xff]
  %432 = vset.pattern.permute.xlu0 0
  %433 = vperm.xlu0 %432, %v423
  %v434 = vpop.permute.xlu0 %433
  %437 = vset.pattern.permute.xlu0 0
  %438 = vperm.xlu0 %437, %v424
  %v439 = vpop.permute.xlu0 %438
  %442 = vset.pattern.permute.xlu0 0
  %443 = vperm.xlu0 %442, %v425
  %v444 = vpop.permute.xlu0 %443
  %447 = vset.pattern.permute.xlu0 0
  %448 = vperm.xlu0 %447, %v426
  %v449 = vpop.permute.xlu0 %448
  %452 = vset.pattern.permute.xlu0 0
  %453 = vperm.xlu0 %452, %v427
  %v454 = vpop.permute.xlu0 %453
  %457 = vset.pattern.permute.xlu0 0
  %458 = vperm.xlu0 %457, %v428
  %v459 = vpop.permute.xlu0 %458
  %462 = vset.pattern.permute.xlu0 0
  %463 = vperm.xlu0 %462, %v429
  %v464 = vpop.permute.xlu0 %463
  %467 = vset.pattern.permute.xlu0 0
  %468 = vperm.xlu0 %467, %v430
  %v469 = vpop.permute.xlu0 %468
  %v473 = vunpack.c.l.b16 %v420
  %v474 = vunpack.c.l.b16 %v421
  %v475 = vpack.c.b16 %v474, %v473
  %477 = vmatprep.subr.bf16.mxu0 0
  %478 = vmatpush1.bf16.msra.mxu0 %v475
  %479 = vmatprep.subr.bf16.mxu0 0
  %480 = vmatpush1.bf16.msra.mxu0 0
  %481 = vmatprep.subr.bf16.mxu0 0
  %482 = vmatpush1.bf16.msra.mxu0 0
  %483 = vmatprep.subr.bf16.mxu0 0
  %484 = vmatpush1.bf16.msra.mxu0 0
  %485 = vmatprep.subr.bf16.mxu0 0
  %486 = vmatpush1.bf16.msra.mxu0 0
  %487 = vmatprep.subr.bf16.mxu0 0
  %488 = vmatpush1.bf16.msra.mxu0 0
  %489 = vmatprep.subr.bf16.mxu0 0
  %490 = vmatpush1.bf16.msra.mxu0 0
  %491 = vmatprep.subr.bf16.mxu0 0
  %492 = vmatpush1.bf16.msra.mxu0 0
  %493 = vmatprep.subr.bf16.mxu0 0
  %494 = vmatpush1.bf16.msra.mxu0 0
  %495 = vmatprep.subr.bf16.mxu0 0
  %496 = vmatpush1.bf16.msra.mxu0 0
  %497 = vmatprep.subr.bf16.mxu0 0
  %498 = vmatpush1.bf16.msra.mxu0 0
  %499 = vmatprep.subr.bf16.mxu0 0
  %500 = vmatpush1.bf16.msra.mxu0 0
  %501 = vmatprep.subr.bf16.mxu0 0
  %502 = vmatpush1.bf16.msra.mxu0 0
  %503 = vmatprep.subr.bf16.mxu0 0
  %504 = vmatpush1.bf16.msra.mxu0 0
  %505 = vmatprep.subr.bf16.mxu0 0
  %506 = vmatpush1.bf16.msra.mxu0 0
  %507 = vmatprep.subr.bf16.mxu0 0
  %508 = vmatpush1.bf16.msra.mxu0 0
  %509 = vmatprep.mubr.bf16.mxu0 0
  %510 = vmatmul.mubr.bf16.gmra.mrb[0].mxu0 %v131
  %v511 = vpop.f32.mrb[0].mxu0
  %v512 = vadd.f32 %v434, %v511
  %v513 = vpop.f32.mrb[0].mxu0
  %v514 = vpop.f32.mrb[0].mxu0
  %v515 = vadd.f32 %v439, %v514
  %v516 = vpop.f32.mrb[0].mxu0
  %517 = vmatprep.mubr.bf16.mxu0 0
  %518 = vmatmul.mubr.bf16.gmra.mrb[0].mxu0 %v134
  %v519 = vpop.f32.mrb[0].mxu0
  %v520 = vadd.f32 %v444, %v519
  %v521 = vpop.f32.mrb[0].mxu0
  %v522 = vpop.f32.mrb[0].mxu0
  %v523 = vadd.f32 %v449, %v522
  %v524 = vpop.f32.mrb[0].mxu0
  %525 = vmatprep.mubr.bf16.mxu0 0
  %526 = vmatmul.mubr.bf16.gmra.mrb[0].mxu0 %v137
  %v527 = vpop.f32.mrb[0].mxu0
  %v528 = vadd.f32 %v454, %v527
  %v529 = vpop.f32.mrb[0].mxu0
  %v530 = vpop.f32.mrb[0].mxu0
  %v531 = vadd.f32 %v459, %v530
  %v532 = vpop.f32.mrb[0].mxu0
  %533 = vmatprep.mubr.bf16.mxu0 0
  %534 = vmatmul.mubr.bf16.gmra.mrb[0].mxu0 %v140
  %v535 = vpop.f32.mrb[0].mxu0
  %v536 = vadd.f32 %v464, %v535
  %v537 = vpop.f32.mrb[0].mxu0
  %v538 = vpop.f32.mrb[0].mxu0
  %v539 = vadd.f32 %v469, %v538
  %v540 = vpop.f32.mrb[0].mxu0
  %541 = vdwg.mxu0
  %v542 = vmax.f32 %v512, 0.0
  %v543 = vmax.f32 %v515, 0.0
  %v544 = vmax.f32 %v520, 0.0
  %v545 = vmax.f32 %v523, 0.0
  %v546 = vmax.f32 %v528, 0.0
  %v547 = vmax.f32 %v531, 0.0
  %v548 = vmax.f32 %v536, 0.0
  %v549 = vmax.f32 %v539, 0.0
  %v550 = vpack.c.bf16 %v543, %v542
  %v551 = vpack.c.bf16 %v545, %v544
  %v552 = vpack.c.bf16 %v547, %v546
  %v553 = vpack.c.bf16 %v549, %v548
  %554 = vmatprep.subr.bf16.mxu0 0
  %555 = vmatpush1.bf16.msra.mxu0 %v550
  %556 = vmatprep.subr.bf16.mxu0 0
  %557 = vmatpush1.bf16.msra.mxu0 %v551
  %558 = vmatprep.subr.bf16.mxu0 0
  %559 = vmatpush1.bf16.msra.mxu0 %v552
  %560 = vmatprep.subr.bf16.mxu0 0
  %561 = vmatpush1.bf16.msra.mxu0 %v553
  %562 = vmatprep.subr.bf16.mxu0 0
  %563 = vmatpush1.bf16.msra.mxu0 0
  %564 = vmatprep.subr.bf16.mxu0 0
  %565 = vmatpush1.bf16.msra.mxu0 0
  %566 = vmatprep.subr.bf16.mxu0 0
  %567 = vmatpush1.bf16.msra.mxu0 0
  %568 = vmatprep.subr.bf16.mxu0 0
  %569 = vmatpush1.bf16.msra.mxu0 0
  %570 = vmatprep.subr.bf16.mxu0 0
  %571 = vmatpush1.bf16.msra.mxu0 0
  %572 = vmatprep.subr.bf16.mxu0 0
  %573 = vmatpush1.bf16.msra.mxu0 0
  %574 = vmatprep.subr.bf16.mxu0 0
  %575 = vmatpush1.bf16.msra.mxu0 0
  %576 = vmatprep.subr.bf16.mxu0 0
  %577 = vmatpush1.bf16.msra.mxu0 0
  %578 = vmatprep.subr.bf16.mxu0 0
  %579 = vmatpush1.bf16.msra.mxu0 0
  %580 = vmatprep.subr.bf16.mxu0 0
  %581 = vmatpush1.bf16.msra.mxu0 0
  %582 = vmatprep.subr.bf16.mxu0 0
  %583 = vmatpush1.bf16.msra.mxu0 0
  %584 = vmatprep.subr.bf16.mxu0 0
  %585 = vmatpush1.bf16.msra.mxu0 0
  %586 = vmatprep.mubr.bf16.mxu0 0
  %587 = vmatmul.mubr.bf16.gmra.mrb[0].mxu0 %v281
  %v588 = vpop.f32.mrb[0].mxu0
  %v589 = vadd.f32 %v222, %v588
  %v590 = vpop.f32.mrb[0].mxu0
  %v591 = vpop.f32.mrb[0].mxu0
  %v592 = vadd.f32 %v227, %v591
  %v593 = vpop.f32.mrb[0].mxu0
  %594 = vmatprep.mubr.bf16.mxu0 0
  %595 = vmatmul.mubr.bf16.gmra.mrb[0].mxu0 %v284
  %v596 = vpop.f32.mrb[0].mxu0
  %v597 = vadd.f32 %v232, %v596
  %v598 = vpop.f32.mrb[0].mxu0
  %v599 = vpop.f32.mrb[0].mxu0
  %v600 = vadd.f32 %v237, %v599
  %v601 = vpop.f32.mrb[0].mxu0
  %602 = vmatprep.mubr.bf16.mxu0 0
  %603 = vmatmul.mubr.bf16.gmra.mrb[0].mxu0 %v287
  %v604 = vpop.f32.mrb[0].mxu0
  %v605 = vadd.f32 %v242, %v604
  %v606 = vpop.f32.mrb[0].mxu0
  %v607 = vpop.f32.mrb[0].mxu0
  %v608 = vadd.f32 %v247, %v607
  %v609 = vpop.f32.mrb[0].mxu0
  %610 = vmatprep.mubr.bf16.mxu0 0
  %611 = vmatmul.mubr.bf16.gmra.mrb[0].mxu0 %v290
  %v612 = vpop.f32.mrb[0].mxu0
  %v613 = vadd.f32 %v252, %v612
  %v614 = vpop.f32.mrb[0].mxu0
  %v615 = vpop.f32.mrb[0].mxu0
  %v616 = vadd.f32 %v257, %v615
  %v617 = vpop.f32.mrb[0].mxu0
  %618 = vdwg.mxu0
  %v619 = vmax.f32 %v589, 0.0
  %v620 = vmax.f32 %v592, 0.0
  %v621 = vmax.f32 %v597, 0.0
  %v622 = vmax.f32 %v600, 0.0
  %v623 = vmax.f32 %v605, 0.0
  %v624 = vmax.f32 %v608, 0.0
  %v625 = vmax.f32 %v613, 0.0
  %v626 = vmax.f32 %v616, 0.0
  %v627 = vpack.c.bf16 %v620, %v619
  %v628 = vpack.c.bf16 %v622, %v621
  %v629 = vpack.c.bf16 %v624, %v623
  %v630 = vpack.c.bf16 %v626, %v625
  %631 = vmatprep.subr.bf16.mxu0 0
  %632 = vmatpush1.bf16.msra.mxu0 %v627
  %633 = vmatprep.subr.bf16.mxu0 0
  %634 = vmatpush1.bf16.msra.mxu0 %v628
  %635 = vmatprep.subr.bf16.mxu0 0
  %636 = vmatpush1.bf16.msra.mxu0 %v629
  %637 = vmatprep.subr.bf16.mxu0 0
  %638 = vmatpush1.bf16.msra.mxu0 %v630
  %639 = vmatprep.subr.bf16.mxu0 0
  %640 = vmatpush1.bf16.msra.mxu0 0
  %641 = vmatprep.subr.bf16.mxu0 0
  %642 = vmatpush1.bf16.msra.mxu0 0
  %643 = vmatprep.subr.bf16.mxu0 0
  %644 = vmatpush1.bf16.msra.mxu0 0
  %645 = vmatprep.subr.bf16.mxu0 0
  %646 = vmatpush1.bf16.msra.mxu0 0
  %647 = vmatprep.subr.bf16.mxu0 0
  %648 = vmatpush1.bf16.msra.mxu0 0
  %649 = vmatprep.subr.bf16.mxu0 0
  %650 = vmatpush1.bf16.msra.mxu0 0
  %651 = vmatprep.subr.bf16.mxu0 0
  %652 = vmatpush1.bf16.msra.mxu0 0
  %653 = vmatprep.subr.bf16.mxu0 0
  %654 = vmatpush1.bf16.msra.mxu0 0
  %655 = vmatprep.subr.bf16.mxu0 0
  %656 = vmatpush1.bf16.msra.mxu0 0
  %657 = vmatprep.subr.bf16.mxu0 0
  %658 = vmatpush1.bf16.msra.mxu0 0
  %659 = vmatprep.subr.bf16.mxu0 0
  %660 = vmatpush1.bf16.msra.mxu0 0
  %661 = vmatprep.subr.bf16.mxu0 0
  %662 = vmatpush1.bf16.msra.mxu0 0
  %663 = vmatprep.mubr.bf16.mxu0 0
  %664 = vmatmul.mubr.bf16.gmra.mrb[0].mxu0 %v375
  %v665 = vpop.f32.mrb[0].mxu0
  %v666 = vadd.f32 %v372, %v665
  %v667 = vpop.f32.mrb[0].mxu0
  %v668 = vpop.f32.mrb[0].mxu0
  %v669 = vpop.f32.mrb[0].mxu0
  %670 = vdwg.mxu0
  %s671 = scalar_lea.vmem %s7, 2
  %672 = vst.msk [vmem:[%s671] sm:$0x3] %vm417, %v666
  // Predicated region
  $region30: #{critic_mlp_forward.1} parent=0 // pred_check
    _
  $region31: #{critic_mlp_forward.1} parent=0 // pred_check_branch
    %674 = sbr.rel (0) target = $region33
  $region32: #{critic_mlp_forward.1} parent=0 // pred_region
    _
  $region33: #{critic_mlp_forward.1} parent=0 // pred_fallthru
    _
  // Predicated region
  $region34: #{critic_mlp_forward.1} parent=0 // pred_check
    _
  $region35: #{critic_mlp_forward.1} parent=0 // pred_check_branch
    %676 = sbr.rel (0) target = $region37
  $region36: #{critic_mlp_forward.1} parent=0 // pred_region
    _
  $region37: #{critic_mlp_forward.1} parent=0 // pred_fallthru
    _

</llo_original>
